<compile_context>
chip_gen: v7x
topology: tpu7x:2x2x1
jax: 0.10.0
libtpu: 0.0.40
codegen_flags: <defaults>
</compile_context>

<pallas_src>
import jax
import jax.numpy as jnp
from jax import lax
from jax.experimental import pallas as pl
from jax.experimental.pallas import tpu as pltpu

K = 10
FEATURE_DIM = K * 3                 # 30
H1, H2, H_OUT = 16, 8, 1            # 30 -> 16 -> 8 -> 1

PACK = 4                            # batch rows packed per VMEM row (4*30 = 120 lanes)
PACKED_DIM = PACK * FEATURE_DIM     # 120
_MAX_TB_ROWS = 2048                 # packed rows / grid step (= 8192 batch rows);
                                    # (2048,128)-padded f32 tile = 1 MiB per buffer.
_SMALL_BATCH_MAX = 1024             # below this, fused jnp beats pallas_call overhead


def _round_up(x, m):
    return ((x + m - 1) // m) * m


def _fold_params(params):
    """Collapse the activation-free 3-layer MLP into y = x @ w_row + c (then tanh)."""
    w1, b1, w2, b2, w3, b3 = params
    w_row = (w3 @ w2 @ w1).reshape(FEATURE_DIM).astype(jnp.float32)          # (30,)
    c = (b1 @ w2.T @ w3.T + b2 @ w3.T + b3).reshape(1).astype(jnp.float32)   # (1,)
    return w_row, c


def _affine_tanh_kernel(x_ref, w_ref, c_ref, o_ref):
    # x_ref: (TB, 120) VMEM  -- 4 batch rows packed per VMEM row (lane-dense)
    # w_ref: (120, 4)  VMEM  -- block-diagonal folded weight, resident across grid
    # c_ref: (1,)      SMEM  -- folded bias scalar
    # o_ref: (TB, 4)   VMEM  -- full-last-dim output block (contiguous stores)
    y = lax.dot_general(
        x_ref[...], w_ref[...],
        dimension_numbers=(((1,), (0,)), ((), ())),   # x as LHS: no transpose of the big tile
        preferred_element_type=jnp.float32,
    )
    o_ref[...] = jnp.tanh(y + c_ref[0]).astype(o_ref.dtype)


def policy_net_forward(features, params, *, use_pallas=None):
    """features: (B, 30) float -> (B, 1) float32."""
    B = features.shape[0]
    x = features.astype(jnp.float32)
    w_row, c = _fold_params(params)

    if use_pallas is None:
        use_pallas = B > _SMALL_BATCH_MAX
    if not use_pallas:
        # Latency path: plain fused XLA op, no custom-call / DMA-setup overhead.
        return jnp.tanh(x @ w_row[:, None] + c[0])

    # ---- pack PACK batch rows per VMEM row: (B,30) -> (B_pack,120) ----
    B_pad = _round_up(B, PACK)
    if B_pad != B:
        x = jnp.pad(x, ((0, B_pad - B), (0, 0)))
    B_pack = B_pad // PACK
    x_pack = x.reshape(B_pack, PACKED_DIM)   # row-major: pure relabeling, order preserved

    # Block-diagonal folded weight: w_pack[i*30 + k, j] = w_row[k] if i == j else 0
    w_pack = (jnp.eye(PACK, dtype=jnp.float32)[:, None, :]
              * w_row[None, :, None]).reshape(PACKED_DIM, PACK)

    # ---- tile sizing: multiple of 8 packed rows; >=2 tiles so both v7x TCs get work ----
    if B_pack > _MAX_TB_ROWS:
        tb = _MAX_TB_ROWS
    elif B_pack >= 16:
        tb = _round_up(pl.cdiv(B_pack, 2), 8)
    else:
        tb = B_pack                          # block == full extent, always legal
    num_tiles = pl.cdiv(B_pack, tb)

    out = pl.pallas_call(
        _affine_tanh_kernel,
        out_shape=jax.ShapeDtypeStruct((B_pack, PACK), jnp.float32),
        grid=(num_tiles,),
        in_specs=[
            pl.BlockSpec((tb, PACKED_DIM), lambda i: (i, 0)),      # streamed x tiles
            pl.BlockSpec((PACKED_DIM, PACK), lambda i: (0, 0)),    # resident folded weight
            pl.BlockSpec(memory_space=pltpu.MemorySpace.SMEM),     # folded bias scalar (1,)
        ],
        out_specs=pl.BlockSpec((tb, PACK), lambda i: (i, 0)),
        compiler_params=pltpu.CompilerParams(
            dimension_semantics=("parallel",),                     # megacore sharding on v7x
        ),
    )(x_pack, w_pack, c)

    # (B_pack, PACK) flattens back to the original batch order; drop pad rows.
    return out.reshape(B_pad, 1)[:B]


def init_params(key):
    """torch.nn.Linear default init (U[-1/sqrt(fan_in), 1/sqrt(fan_in)]).
    Weight shapes follow PyTorch convention: (out_features, in_features)."""
    def linear_init(k, out_f, in_f):
        kw, kb = jax.random.split(k)
        bound = 1.0 / jnp.sqrt(jnp.float32(in_f))
        w = jax.random.uniform(kw, (out_f, in_f), jnp.float32, -bound, bound)
        b = jax.random.uniform(kb, (out_f,), jnp.float32, -bound, bound)
        return w, b

    k1, k2, k3 = jax.random.split(key, 3)
    w1, b1 = linear_init(k1, H1, FEATURE_DIM)   # (16, 30)
    w2, b2 = linear_init(k2, H2, H1)            # (8, 16)
    w3, b3 = linear_init(k3, H_OUT, H2)         # (1, 8)
    return w1, b1, w2, b2, w3, b3


def _reference(features, params):
    w1, b1, w2, b2, w3, b3 = params
    h = features @ w1.T + b1
    h = h @ w2.T + b2
    h = h @ w3.T + b3
    return jnp.tanh(h)


if __name__ == "__main__":
    key = jax.random.PRNGKey(0)
    k_param, k_a, k_b, k_c = jax.random.split(key, 4)
    params = init_params(k_param)

    # 1) Small latency-style batch -> fused jnp path.
    batch_small = 8
    f_small = jax.random.normal(k_a, (batch_small, FEATURE_DIM), jnp.float32)
    o_small = jax.block_until_ready(policy_net_forward(f_small, params))
    assert o_small.shape == (batch_small, 1), o_small.shape
    assert jnp.allclose(o_small, _reference(f_small, params), atol=1e-5, rtol=1e-5), \
        "mismatch vs reference (B=8, jnp path)"

    # 2) Pallas streaming path, forced: 2 tiles with a partial last tile.
    batch_mid = 1100
    f_mid = jax.random.normal(k_b, (batch_mid, FEATURE_DIM), jnp.float32)
    o_mid = jax.block_until_ready(policy_net_forward(f_mid, params, use_pallas=True))
    assert o_mid.shape == (batch_mid, 1), o_mid.shape
    assert jnp.allclose(o_mid, _reference(f_mid, params), atol=1e-5, rtol=1e-5), \
        "mismatch vs reference (B=1100, pallas path)"

    # 3) Pallas path exercising B % PACK != 0 padding plus multiple tiles.
    batch_pad = 4099
    f_pad = jax.random.normal(k_c, (batch_pad, FEATURE_DIM), jnp.float32)
    o_pad = jax.block_until_ready(policy_net_forward(f_pad, params, use_pallas=True))
    assert o_pad.shape == (batch_pad, 1), o_pad.shape
    assert jnp.allclose(o_pad, _reference(f_pad, params), atol=1e-5, rtol=1e-5), \
        "mismatch vs reference (B=4099, pallas path with pad)"

    print("KERNEL_OK")
</pallas_src>

<mosaic_0001>
module attributes {stable_mosaic.version = 11 : i64} {
  func.func @_affine_tanh_kernel(%arg0: i32, %arg1: memref<144x120xf32, #tpu.memory_space<vmem>>, %arg2: memref<120x4xf32, #tpu.memory_space<vmem>>, %arg3: memref<1xf32, #tpu.memory_space<smem>>, %arg4: memref<144x4xf32, #tpu.memory_space<vmem>>) attributes {dimension_semantics = [#tpu.dimension_semantics<parallel>], iteration_bounds = array<i64: 2>, scalar_prefetch = 0 : i64, scratch_operands = 0 : i64, tpu.core_type = #tpu.core_type<tc>, window_params = [{transform_indices = @transform_0, window_bounds = array<i64: 144, 120>}, {pipeline_mode = #tpu.pipeline_mode<synchronous>, transform_indices = @transform_1, window_bounds = array<i64: 120, 4>}, {transform_indices = @transform_2, window_bounds = array<i64: 1>}, {transform_indices = @transform_3, window_bounds = array<i64: 144, 4>}]} {
    %c0 = arith.constant 0 : index
    %c0_0 = arith.constant 0 : index
    %0 = vector.load %arg1[%c0, %c0_0] : memref<144x120xf32, #tpu.memory_space<vmem>>, vector<144x120xf32>
    %c0_1 = arith.constant 0 : index
    %c0_2 = arith.constant 0 : index
    %1 = vector.load %arg2[%c0_1, %c0_2] : memref<120x4xf32, #tpu.memory_space<vmem>>, vector<120x4xf32>
    %cst = arith.constant dense<0.000000e+00> : vector<144x4xf32>
    %2 = tpu.matmul %0, %1, %cst {dimension_numbers = #tpu.dot_dimension_numbers<[1], [0], [0], [1], [0, 0, 1, 1], [], []>} : vector<144x120xf32>, vector<120x4xf32>, vector<144x4xf32> -> vector<144x4xf32>
    %c0_3 = arith.constant 0 : index
    %3 = memref.load %arg3[%c0_3] : memref<1xf32, #tpu.memory_space<smem>>
    %4 = vector.broadcast %3 : f32 to vector<144x4xf32>
    %5 = arith.addf %2, %4 : vector<144x4xf32>
    %6 = math.tanh %5 : vector<144x4xf32>
    %c0_4 = arith.constant 0 : index
    %c0_5 = arith.constant 0 : index
    %7 = vector.load %arg4[%c0_4, %c0_5] : memref<144x4xf32, #tpu.memory_space<vmem>>, vector<144x4xf32>
    tpu.vector_store %arg4[%c0_4, %c0_5], %6 {strides = array<i32>} : memref<144x4xf32, #tpu.memory_space<vmem>>, vector<144x4xf32>,
    return
  }
  func.func @transform_0(%arg0: i32) -> (i32, i32) {
    %c0_i32 = arith.constant 0 : i32
    %c0_i32_0 = arith.constant 0 : i32
    return %arg0, %c0_i32 : i32, i32
  }
  func.func @transform_1(%arg0: i32) -> (i32, i32) {
    %c0_i32 = arith.constant 0 : i32
    %c0_i32_0 = arith.constant 0 : i32
    %c0_i32_1 = arith.constant 0 : i32
    return %c0_i32, %c0_i32_0 : i32, i32
  }
  func.func @transform_2(%arg0: i32) -> i32 {
    %c0_i32 = arith.constant 0 : i32
    %c0_i32_0 = arith.constant 0 : i32
    return %c0_i32 : i32
  }
  func.func @transform_3(%arg0: i32) -> (i32, i32) {
    %c0_i32 = arith.constant 0 : i32
    %c0_i32_0 = arith.constant 0 : i32
    return %arg0, %c0_i32 : i32, i32
  }
}

</mosaic_0001>

<llo_original>
// kernel: tpu_custom_call.1
$region0: #{tpu_custom_call.1}
  #allocation0 [shape = 'u32[]', space=smem, size = 0x4, offset = 0x4, fixed_abs, tag = 'smem constant byte address 0x4 - core index']
  #allocation1 [shape = 'u32[144,128]{1,0:T(1,128)}', space=vmem, size = 0x12000, scoped, tag = 'internal scratch']
  #allocation2 [shape = 'f32[1]{0:T(128)S(6)}', space=smem, size = 0x200, scoped, tag = 'scoped memory for tpu_custom_call.1']
  %s0 = inlined_call_operand.hbm [shape: f32[275,120], index: 0, kind: input, shape index: {}]
  %s1 = inlined_call_operand.vmem [shape: f32[120,4], index: 1, kind: input, shape index: {}]
  %s2 = inlined_call_operand.<no memory space> [shape: f32[1], index: 2, kind: input, shape index: {}]
  %s3 = inlined_call_operand.vmem [shape: f32[275,4], index: 3, kind: output, shape index: {}]
  %s4 = sld [smem:[#allocation0]]
  $region97: #{tpu_custom_call.1} parent=0
    _
  %s6 = ssub.s32 1, %s4
  %s7 = scalar_select 0, %s6, %s4
  %8 = sst [smem:[#allocation2]] %s2
  $region1: #{tpu_custom_call.1} parent=0
    #allocation3 [shape = 'u8[147456]{0}', space=vmem, size = 0x24000, scoped, tag = 'input window, operand 0']
    #allocation4 [shape = 's32[2]{0}', space=sflag, size = 0x8, scoped, tag = 'scoped memory for tpu_custom_call.1']
    #allocation5 [shape = 'u8[147456]{0}', space=vmem, size = 0x24000, scoped, tag = 'output window, operand 0']
    %9 = vsyncpa [#allocation4], 0
    %s10 = scalar_lea.sflag [#allocation4], 1
    %11 = vsyncpa %s10, 0
    loop: start=0, step=1, limit=4
    $region2: #{tpu_custom_call.1} parent=1 // loop_pre_header
      _
    $region3: #{tpu_custom_call.1} parent=1 // loop_header
      %s13 = sphi 0, %s17
      %p14 = scmp.ge.s32.totalorder %s13, 4
      %s23 = sphi 0, %s25
      %s26 = sphi 0, %s23
      %s27 = sphi 0, %s26
      %s43 = sphi 0, %s27
      %s47 = sphi 0, %s47
      %s49 = sphi 0, %s47
      %s50 = sphi 0, %s49
      %s64 = sphi 0, %s50
      %s68 = sphi 0, %s68
      %s70 = sphi 0, %s68
      %s71 = sphi 0, %s70
      %s85 = sphi 0, %s71
      %s91 = sphi 0, %s93
      %s94 = sphi 0, %s91
      %s95 = sphi 0, %s94
      %s111 = sphi 0, %s95
    $region4: #{tpu_custom_call.1} parent=1 // loop_header_branch
      %16 = sbr.rel (%p14) target = $region8
    $region5: #{tpu_custom_call.1} parent=1 // loop_body
      %s18 = ssub.s32 %s13, 1
      %s19 = ssub.s32 %s13, 2
      %s20 = sadd.s32 %s13, 1
      %s21 = ssub.s32 %s13, %s20
      %p22 = scmp.eq.s32.totalorder %s21, 0
      %s24 = sadd.s32 %s23, 1
      %s25 = scalar_select %p22, %s23, %s24
      %p28 = pneg %p22
      %p29 = scmp.eq.s32.totalorder %s13, 1
      %p30 = por %p28, %p29
      %p31 = scmp.ne.s32.totalorder %s23, %s26
      %p32 = scmp.eq.s32.totalorder %s13, 0
      %p33 = por %p31, %p32
      %p34 = scmp.ne.s32.totalorder %s23, %s26
      %p35 = scmp.eq.s32.totalorder %s18, 1
      %p36 = por %p34, %p35
      %p37 = scmp.ne.s32.totalorder %s26, %s27
      %p38 = scmp.eq.s32.totalorder %s18, 0
      %p39 = por %p37, %p38
      %p40 = scmp.ne.s32.totalorder %s26, %s27
      %p41 = scmp.eq.s32.totalorder %s19, 1
      %p42 = por %p40, %p41
      %p44 = scmp.ne.s32.totalorder %s27, %s43
      %p45 = scmp.eq.s32.totalorder %s19, 0
      %p46 = por %p44, %p45
      %s48 = sadd.s32 %s47, 1
      %p51 = scmp.eq.s32.totalorder %s13, 1
      %p52 = scmp.ne.s32.totalorder %s47, %s49
      %p53 = scmp.eq.s32.totalorder %s13, 0
      %p54 = por %p52, %p53
      %p55 = scmp.ne.s32.totalorder %s47, %s49
      %p56 = scmp.eq.s32.totalorder %s18, 1
      %p57 = por %p55, %p56
      %p58 = scmp.ne.s32.totalorder %s49, %s50
      %p59 = scmp.eq.s32.totalorder %s18, 0
      %p60 = por %p58, %p59
      %p61 = scmp.ne.s32.totalorder %s49, %s50
      %p62 = scmp.eq.s32.totalorder %s19, 1
      %p63 = por %p61, %p62
      %p65 = scmp.ne.s32.totalorder %s50, %s64
      %p66 = scmp.eq.s32.totalorder %s19, 0
      %p67 = por %p65, %p66
      %s69 = sadd.s32 %s68, 1
      %p72 = scmp.eq.s32.totalorder %s13, 1
      %p73 = scmp.ne.s32.totalorder %s68, %s70
      %p74 = scmp.eq.s32.totalorder %s13, 0
      %p75 = por %p73, %p74
      %p76 = scmp.ne.s32.totalorder %s68, %s70
      %p77 = scmp.eq.s32.totalorder %s18, 1
      %p78 = por %p76, %p77
      %p79 = scmp.ne.s32.totalorder %s70, %s71
      %p80 = scmp.eq.s32.totalorder %s18, 0
      %p81 = por %p79, %p80
      %p82 = scmp.ne.s32.totalorder %s70, %s71
      %p83 = scmp.eq.s32.totalorder %s19, 1
      %p84 = por %p82, %p83
      %p86 = scmp.ne.s32.totalorder %s71, %s85
      %p87 = scmp.eq.s32.totalorder %s19, 0
      %p88 = por %p86, %p87
      %s89 = ssub.s32 %s13, %s20
      %p90 = scmp.eq.s32.totalorder %s89, 0
      %s92 = sadd.s32 %s91, 1
      %s93 = scalar_select %p90, %s91, %s92
      %p96 = pneg %p90
      %p97 = scmp.eq.s32.totalorder %s13, 1
      %p98 = por %p96, %p97
      %p99 = scmp.ne.s32.totalorder %s91, %s94
      %p100 = scmp.eq.s32.totalorder %s13, 0
      %p101 = por %p99, %p100
      %p102 = scmp.ne.s32.totalorder %s91, %s94
      %p103 = scmp.eq.s32.totalorder %s18, 1
      %p104 = por %p102, %p103
      %p105 = scmp.ne.s32.totalorder %s94, %s95
      %p106 = scmp.eq.s32.totalorder %s18, 0
      %p107 = por %p105, %p106
      %p108 = scmp.ne.s32.totalorder %s94, %s95
      %p109 = scmp.eq.s32.totalorder %s19, 1
      %p110 = por %p108, %p109
      %p112 = scmp.ne.s32.totalorder %s95, %s111
      %p113 = scmp.eq.s32.totalorder %s19, 0
      %p114 = por %p112, %p113
      %p115 = scmp.le.s32.totalorder 1, %s13
      %p116 = scmp.lt.s32.totalorder %s13, 3
      %p117 = pnand %p115, %p116
      %p118 = pneg %p117
      // Predicated region
      $region9: #{tpu_custom_call.1} parent=5 // pred_check
        _
      $region10: #{tpu_custom_call.1} parent=5 // pred_check_branch
        %120 = sbr.rel (%p117) target = $region12
      $region11: #{tpu_custom_call.1} parent=5 // pred_region
        %s121 = ssub.s32 %s13, 1
        // Predicated region
        $region13: #{tpu_custom_call.1} parent=11 // pred_check
          %p122 = pneg %p60
        $region14: #{tpu_custom_call.1} parent=11 // pred_check_branch
          %124 = sbr.rel (%p122) target = $region16
        $region15: #{tpu_custom_call.1} parent=11 // pred_region
          _
        $region16: #{tpu_custom_call.1} parent=11 // pred_fallthru
          _
        // Predicated region
        $region17: #{tpu_custom_call.1} parent=11 // pred_check
          %p125 = pneg %p81
        $region18: #{tpu_custom_call.1} parent=11 // pred_check_branch
          %127 = sbr.rel (%p125) target = $region20
        $region19: #{tpu_custom_call.1} parent=11 // pred_region
          _
        $region20: #{tpu_custom_call.1} parent=11 // pred_fallthru
          _
      $region12: #{tpu_custom_call.1} parent=5 // pred_fallthru
        _
      %p128 = scmp.lt.s32.totalorder %s13, 2
      // Predicated region
      $region21: #{tpu_custom_call.1} parent=5 // pred_check
        %p129 = pneg %p128
      $region22: #{tpu_custom_call.1} parent=5 // pred_check_branch
        %131 = sbr.rel (%p129) target = $region24
      $region23: #{tpu_custom_call.1} parent=5 // pred_region
        // Predicated region
        $region25: #{tpu_custom_call.1} parent=23 // pred_check
          %p132 = pneg %p33
        $region26: #{tpu_custom_call.1} parent=23 // pred_check_branch
          %134 = sbr.rel (%p132) target = $region28
        $region27: #{tpu_custom_call.1} parent=23 // pred_region
          %s135 = sand.u32 %s23, 1
          %s136 = scalar_lea.sflag [#allocation4], %s135
          %s137 = sand.u32 %s23, 1
          %s138 = smul.addr %s137, 144
          %s139 = scalar_lea.vmem [#allocation3], %s138
          %s140 = smul.u32 18, %s13
          %s141 = ssub.s32 35, %s140
          %p142 = scmp.lt.s32.totalorder %s141, 18
          %s143 = scalar_select %p142, %s141, 18
          %s144 = smul.u32 128, %s143
          %s146 = ssub.s32 2304, %s144
          %147 = vsyncadd %s136, %s146
          %p148 = scmp.ne.s32.totalorder 0, %s144
          %s149 = smul.addr %s140, 128
          %s150 = scalar_lea.hbm %s0, %s149
          %s151 = smul.u32 8, %s143
          %s152 = sshll.u32 %s139, 4
          %s153 = int_to_ptr.vmem [resolvable:$true] %s152
          %s154 = sshll.u32 %s151, 4
          %158 = dma.hbm_to_vmem [thread:$0]  (%p148), %s150, %s154, %s153, %s136, 128, 128, 8
        $region28: #{tpu_custom_call.1} parent=23 // pred_fallthru
          _
      $region24: #{tpu_custom_call.1} parent=5 // pred_fallthru
        _
      %p159 = scmp.le.s32.totalorder 1, %s13
      %p160 = scmp.lt.s32.totalorder %s13, 3
      %p161 = pnand %p159, %p160
      %p162 = pneg %p161
      // Predicated region
      $region29: #{tpu_custom_call.1} parent=5 // pred_check
        _
      $region30: #{tpu_custom_call.1} parent=5 // pred_check_branch
        %164 = sbr.rel (%p161) target = $region32
      $region31: #{tpu_custom_call.1} parent=5 // pred_region
        %s165 = ssub.s32 %s13, 1
        %s166 = sand.u32 %s26, 1
        %s167 = scalar_lea.sflag [#allocation4], %s166
        %s168 = sand.u32 %s26, 1
        %s169 = smul.addr %s168, 144
        %s170 = scalar_lea.vmem [#allocation3], %s169
        // Predicated region
        $region33: #{tpu_custom_call.1} parent=31 // pred_check
          %p171 = pneg %p39
        $region34: #{tpu_custom_call.1} parent=31 // pred_check_branch
          %173 = sbr.rel (%p171) target = $region36
        $region35: #{tpu_custom_call.1} parent=31 // pred_region
          %174 = dma.done %s167, 2304
        $region36: #{tpu_custom_call.1} parent=31 // pred_fallthru
          _
        %s175 = sand.u32 %s26, 1
        %s176 = scalar_lea.sflag [#allocation4], %s175
        %s177 = sand.u32 %s26, 1
        %s178 = smul.addr %s177, 144
        %s179 = scalar_lea.vmem [#allocation3], %s178
        %p180 = pneg %p39
        %p181 = pneg %p36
        %p182 = pneg %p60
        %p183 = pneg %p57
        %p184 = pneg %p81
        %p185 = pneg %p78
        %p186 = pneg %p107
        %p187 = pneg %p104
        %s188 = sand.u32 %s94, 1
        %s189 = sand.u32 %s94, 1
        %s190 = smul.addr %s189, 144
        %s191 = scalar_lea.vmem [#allocation5], %s190
        %s192 = smul.u32 18, %s18
        %s193 = ssub.s32 35, %s192
        %p194 = scmp.lt.s32.totalorder %s193, 18
        %s195 = scalar_select %p194, %s193, 18
        %s196 = smul.u32 128, %s195
        %s197 = smul.u32 18, %s18
        %s198 = ssub.s32 35, %s197
        %p199 = scmp.lt.s32.totalorder %s198, 18
        %s200 = scalar_select %p199, %s198, 18
        %s201 = smul.u32 128, %s200
        %v202 = vld [vmem:[%s170] sm:$0xff]
        %v203 = vld [vmem:[%s170 + $0x8] sm:$0xff]
        %v204 = vld [vmem:[%s170 + $0x10] sm:$0xff]
        %v205 = vld [vmem:[%s170 + $0x18] sm:$0xff]
        %v206 = vld [vmem:[%s170 + $0x20] sm:$0xff]
        %v207 = vld [vmem:[%s170 + $0x28] sm:$0xff]
        %v208 = vld [vmem:[%s170 + $0x30] sm:$0xff]
        %v209 = vld [vmem:[%s170 + $0x38] sm:$0xff]
        %v210 = vld [vmem:[%s170 + $0x40] sm:$0xff]
        %v211 = vld [vmem:[%s170 + $0x48] sm:$0xff]
        %v212 = vld [vmem:[%s170 + $0x50] sm:$0xff]
        %v213 = vld [vmem:[%s170 + $0x58] sm:$0xff]
        %v214 = vld [vmem:[%s170 + $0x60] sm:$0xff]
        %v215 = vld [vmem:[%s170 + $0x68] sm:$0xff]
        %v216 = vld [vmem:[%s170 + $0x70] sm:$0xff]
        %v217 = vld [vmem:[%s170 + $0x78] sm:$0xff]
        %v218 = vld [vmem:[%s170 + $0x80] sm:$0xff]
        %v219 = vld [vmem:[%s170 + $0x88] sm:$0xff]
        %v220 = vld [vmem:[%s1] sm:$0xff]
        %v221 = vld [vmem:[%s1 + $0x8] sm:$0xff]
        %v222 = vld [vmem:[%s1 + $0x10] sm:$0xff]
        %v223 = vld [vmem:[%s1 + $0x18] sm:$0xff]
        %v224 = vld [vmem:[%s1 + $0x20] sm:$0xff]
        %v225 = vld [vmem:[%s1 + $0x28] sm:$0xff]
        %v226 = vld [vmem:[%s1 + $0x30] sm:$0xff]
        %v227 = vld [vmem:[%s1 + $0x38] sm:$0xff]
        %v228 = vld [vmem:[%s1 + $0x40] sm:$0xff]
        %v229 = vld [vmem:[%s1 + $0x48] sm:$0xff]
        %v230 = vld [vmem:[%s1 + $0x50] sm:$0xff]
        %v231 = vld [vmem:[%s1 + $0x58] sm:$0xff]
        %v232 = vld [vmem:[%s1 + $0x60] sm:$0xff]
        %v233 = vld [vmem:[%s1 + $0x68] sm:$0xff]
        %v234 = vld [vmem:[%s1 + $0x70] sm:$0xff]
        %s235 = sld [smem:[#allocation2]]
        %v236 = vstv %s235
        %vm237 = vcmask 982016
        %v239 = vsel %vm237, %v202, 0
        %v242 = vsel %vm237, %v203, 0
        %v245 = vsel %vm237, %v204, 0
        %v248 = vsel %vm237, %v205, 0
        %v251 = vsel %vm237, %v206, 0
        %v254 = vsel %vm237, %v207, 0
        %v257 = vsel %vm237, %v208, 0
        %v260 = vsel %vm237, %v209, 0
        %v263 = vsel %vm237, %v210, 0
        %v266 = vsel %vm237, %v211, 0
        %v269 = vsel %vm237, %v212, 0
        %v272 = vsel %vm237, %v213, 0
        %v275 = vsel %vm237, %v214, 0
        %v278 = vsel %vm237, %v215, 0
        %v281 = vsel %vm237, %v216, 0
        %v284 = vsel %vm237, %v217, 0
        %v287 = vsel %vm237, %v218, 0
        %v290 = vsel %vm237, %v219, 0
        %292 = vmatprep.subr.mxu0 0.0
        %293 = vmatpush1.msra.mxu0 %v220
        %294 = vmatprep.subr.mxu0 0.0
        %295 = vmatpush1.msra.mxu0 %v221
        %296 = vmatprep.subr.mxu0 0.0
        %297 = vmatpush1.msra.mxu0 %v222
        %298 = vmatprep.subr.mxu0 0.0
        %299 = vmatpush1.msra.mxu0 %v223
        %300 = vmatprep.subr.mxu0 0.0
        %301 = vmatpush1.msra.mxu0 %v224
        %302 = vmatprep.subr.mxu0 0.0
        %303 = vmatpush1.msra.mxu0 %v225
        %304 = vmatprep.subr.mxu0 0.0
        %305 = vmatpush1.msra.mxu0 %v226
        %306 = vmatprep.subr.mxu0 0.0
        %307 = vmatpush1.msra.mxu0 %v227
        %308 = vmatprep.subr.mxu0 0.0
        %309 = vmatpush1.msra.mxu0 %v228
        %310 = vmatprep.subr.mxu0 0.0
        %311 = vmatpush1.msra.mxu0 %v229
        %312 = vmatprep.subr.mxu0 0.0
        %313 = vmatpush1.msra.mxu0 %v230
        %314 = vmatprep.subr.mxu0 0.0
        %315 = vmatpush1.msra.mxu0 %v231
        %316 = vmatprep.subr.mxu0 0.0
        %317 = vmatpush1.msra.mxu0 %v232
        %318 = vmatprep.subr.mxu0 0.0
        %319 = vmatpush1.msra.mxu0 %v233
        %320 = vmatprep.subr.mxu0 0.0
        %321 = vmatpush1.msra.mxu0 %v234
        %322 = vmatprep.subr.mxu0 0.0
        %323 = vmatpush1.msra.mxu0 0.0
        %324 = vmatprep.subr.mxu0 0.0
        %325 = vmatpush1.msra.mxu0 0.0
        %326 = vmatprep.subr.mxu0 0.0
        %327 = vmatpush1.msra.mxu0 0.0
        %328 = vmatprep.subr.mxu0 0.0
        %329 = vmatpush1.msra.mxu0 0.0
        %330 = vmatprep.subr.mxu0 0.0
        %331 = vmatpush1.msra.mxu0 0.0
        %332 = vmatprep.subr.mxu0 0.0
        %333 = vmatpush1.msra.mxu0 0.0
        %334 = vmatprep.subr.mxu0 0.0
        %335 = vmatpush1.msra.mxu0 0.0
        %336 = vmatprep.subr.mxu0 0.0
        %337 = vmatpush1.msra.mxu0 0.0
        %338 = vmatprep.subr.mxu0 0.0
        %339 = vmatpush1.msra.mxu0 0.0
        %340 = vmatprep.subr.mxu0 0.0
        %341 = vmatpush1.msra.mxu0 0.0
        %342 = vmatprep.subr.mxu0 0.0
        %343 = vmatpush1.msra.mxu0 0.0
        %344 = vmatprep.subr.mxu0 0.0
        %345 = vmatpush1.msra.mxu0 0.0
        %346 = vmatprep.subr.mxu0 0.0
        %347 = vmatpush1.msra.mxu0 0.0
        %348 = vmatprep.subr.mxu0 0.0
        %349 = vmatpush1.msra.mxu0 0.0
        %350 = vmatprep.subr.mxu0 0.0
        %351 = vmatpush1.msra.mxu0 0.0
        %352 = vmatprep.subr.mxu0 0.0
        %353 = vmatpush1.msra.mxu0 0.0
        %354 = vmatprep.subr.mxu0 0.0
        %355 = vmatpush1.msra.mxu0 0.0
        %356 = vmatprep.mubr.f32.mxu0 0.0
        %357 = vmatmul.mubr.f32.gmra.mrb[0].mxu0 %v239
        %v358 = vpop.f32.mrb[0].mxu0
        %v359 = vadd.f32 %v236, %v358
        %v360 = vpop.f32.mrb[0].mxu0
        %361 = vmatprep.mubr.f32.mxu0 0.0
        %362 = vmatmul.mubr.f32.gmra.mrb[0].mxu0 %v242
        %v363 = vpop.f32.mrb[0].mxu0
        %v364 = vadd.f32 %v236, %v363
        %v365 = vpop.f32.mrb[0].mxu0
        %366 = vmatprep.mubr.f32.mxu0 0.0
        %367 = vmatmul.mubr.f32.gmra.mrb[0].mxu0 %v245
        %v368 = vpop.f32.mrb[0].mxu0
        %v369 = vadd.f32 %v236, %v368
        %v370 = vpop.f32.mrb[0].mxu0
        %371 = vmatprep.mubr.f32.mxu0 0.0
        %372 = vmatmul.mubr.f32.gmra.mrb[0].mxu0 %v248
        %v373 = vpop.f32.mrb[0].mxu0
        %v374 = vadd.f32 %v236, %v373
        %v375 = vpop.f32.mrb[0].mxu0
        %376 = vmatprep.mubr.f32.mxu0 0.0
        %377 = vmatmul.mubr.f32.gmra.mrb[0].mxu0 %v251
        %v378 = vpop.f32.mrb[0].mxu0
        %v379 = vadd.f32 %v236, %v378
        %v380 = vpop.f32.mrb[0].mxu0
        %381 = vmatprep.mubr.f32.mxu0 0.0
        %382 = vmatmul.mubr.f32.gmra.mrb[0].mxu0 %v254
        %v383 = vpop.f32.mrb[0].mxu0
        %v384 = vadd.f32 %v236, %v383
        %v385 = vpop.f32.mrb[0].mxu0
        %386 = vmatprep.mubr.f32.mxu0 0.0
        %387 = vmatmul.mubr.f32.gmra.mrb[0].mxu0 %v257
        %v388 = vpop.f32.mrb[0].mxu0
        %v389 = vadd.f32 %v236, %v388
        %v390 = vpop.f32.mrb[0].mxu0
        %391 = vmatprep.mubr.f32.mxu0 0.0
        %392 = vmatmul.mubr.f32.gmra.mrb[0].mxu0 %v260
        %v393 = vpop.f32.mrb[0].mxu0
        %v394 = vadd.f32 %v236, %v393
        %v395 = vpop.f32.mrb[0].mxu0
        %396 = vmatprep.mubr.f32.mxu0 0.0
        %397 = vmatmul.mubr.f32.gmra.mrb[0].mxu0 %v263
        %v398 = vpop.f32.mrb[0].mxu0
        %v399 = vadd.f32 %v236, %v398
        %v400 = vpop.f32.mrb[0].mxu0
        %401 = vmatprep.mubr.f32.mxu0 0.0
        %402 = vmatmul.mubr.f32.gmra.mrb[0].mxu0 %v266
        %v403 = vpop.f32.mrb[0].mxu0
        %v404 = vadd.f32 %v236, %v403
        %v405 = vpop.f32.mrb[0].mxu0
        %406 = vmatprep.mubr.f32.mxu0 0.0
        %407 = vmatmul.mubr.f32.gmra.mrb[0].mxu0 %v269
        %v408 = vpop.f32.mrb[0].mxu0
        %v409 = vadd.f32 %v236, %v408
        %v410 = vpop.f32.mrb[0].mxu0
        %411 = vmatprep.mubr.f32.mxu0 0.0
        %412 = vmatmul.mubr.f32.gmra.mrb[0].mxu0 %v272
        %v413 = vpop.f32.mrb[0].mxu0
        %v414 = vadd.f32 %v236, %v413
        %v415 = vpop.f32.mrb[0].mxu0
        %416 = vmatprep.mubr.f32.mxu0 0.0
        %417 = vmatmul.mubr.f32.gmra.mrb[0].mxu0 %v275
        %v418 = vpop.f32.mrb[0].mxu0
        %v419 = vadd.f32 %v236, %v418
        %v420 = vpop.f32.mrb[0].mxu0
        %421 = vmatprep.mubr.f32.mxu0 0.0
        %422 = vmatmul.mubr.f32.gmra.mrb[0].mxu0 %v278
        %v423 = vpop.f32.mrb[0].mxu0
        %v424 = vadd.f32 %v236, %v423
        %v425 = vpop.f32.mrb[0].mxu0
        %426 = vmatprep.mubr.f32.mxu0 0.0
        %427 = vmatmul.mubr.f32.gmra.mrb[0].mxu0 %v281
        %v428 = vpop.f32.mrb[0].mxu0
        %v429 = vadd.f32 %v236, %v428
        %v430 = vpop.f32.mrb[0].mxu0
        %431 = vmatprep.mubr.f32.mxu0 0.0
        %432 = vmatmul.mubr.f32.gmra.mrb[0].mxu0 %v284
        %v433 = vpop.f32.mrb[0].mxu0
        %v434 = vadd.f32 %v236, %v433
        %v435 = vpop.f32.mrb[0].mxu0
        %436 = vmatprep.mubr.f32.mxu0 0.0
        %437 = vmatmul.mubr.f32.gmra.mrb[0].mxu0 %v287
        %v438 = vpop.f32.mrb[0].mxu0
        %v439 = vadd.f32 %v236, %v438
        %v440 = vpop.f32.mrb[0].mxu0
        %441 = vmatprep.mubr.f32.mxu0 0.0
        %442 = vmatmul.mubr.f32.gmra.mrb[0].mxu0 %v290
        %v443 = vpop.f32.mrb[0].mxu0
        %v444 = vadd.f32 %v236, %v443
        %v445 = vpop.f32.mrb[0].mxu0
        %446 = vdwg.mxu0
        %v447 = vtanh.pop %v359
        %v448 = vtanh.pop %v364
        %v449 = vtanh.pop %v369
        %v450 = vtanh.pop %v374
        %v451 = vtanh.pop %v379
        %v452 = vtanh.pop %v384
        %v453 = vtanh.pop %v389
        %v454 = vtanh.pop %v394
        %v455 = vtanh.pop %v399
        %v456 = vtanh.pop %v404
        %v457 = vtanh.pop %v409
        %v458 = vtanh.pop %v414
        %v459 = vtanh.pop %v419
        %v460 = vtanh.pop %v424
        %v461 = vtanh.pop %v429
        %v462 = vtanh.pop %v434
        %v463 = vtanh.pop %v439
        %v464 = vtanh.pop %v444
        %vm465 = vcmask 31744
        %466 = vst.msk [vmem:[%s191] sm:$0xff] %vm465, %v447
        %467 = vst.msk [vmem:[%s191 + $0x8] sm:$0xff] %vm465, %v448
        %468 = vst.msk [vmem:[%s191 + $0x10] sm:$0xff] %vm465, %v449
        %469 = vst.msk [vmem:[%s191 + $0x18] sm:$0xff] %vm465, %v450
        %470 = vst.msk [vmem:[%s191 + $0x20] sm:$0xff] %vm465, %v451
        %471 = vst.msk [vmem:[%s191 + $0x28] sm:$0xff] %vm465, %v452
        %472 = vst.msk [vmem:[%s191 + $0x30] sm:$0xff] %vm465, %v453
        %473 = vst.msk [vmem:[%s191 + $0x38] sm:$0xff] %vm465, %v454
        %474 = vst.msk [vmem:[%s191 + $0x40] sm:$0xff] %vm465, %v455
        %475 = vst.msk [vmem:[%s191 + $0x48] sm:$0xff] %vm465, %v456
        %476 = vst.msk [vmem:[%s191 + $0x50] sm:$0xff] %vm465, %v457
        %477 = vst.msk [vmem:[%s191 + $0x58] sm:$0xff] %vm465, %v458
        %478 = vst.msk [vmem:[%s191 + $0x60] sm:$0xff] %vm465, %v459
        %479 = vst.msk [vmem:[%s191 + $0x68] sm:$0xff] %vm465, %v460
        %480 = vst.msk [vmem:[%s191 + $0x70] sm:$0xff] %vm465, %v461
        %481 = vst.msk [vmem:[%s191 + $0x78] sm:$0xff] %vm465, %v462
        %482 = vst.msk [vmem:[%s191 + $0x80] sm:$0xff] %vm465, %v463
        %483 = vst.msk [vmem:[%s191 + $0x88] sm:$0xff] %vm465, %v464
        %s484 = sand.u32 %s94, 1
        %s485 = sand.u32 %s94, 1
        %s486 = smul.addr %s485, 144
        %s487 = scalar_lea.vmem [#allocation5], %s486
        // Predicated region
        $region37: #{tpu_custom_call.1} parent=31 // pred_check
          %p488 = pneg %p104
        $region38: #{tpu_custom_call.1} parent=31 // pred_check_branch
          %490 = sbr.rel (%p488) target = $region40
        $region39: #{tpu_custom_call.1} parent=31 // pred_region
          %s491 = smul.u32 18, %s18
          %s492 = ssub.s32 35, %s491
          %p493 = scmp.lt.s32.totalorder %s492, 18
          %s494 = scalar_select %p493, %s492, 18
          %s495 = smul.u32 128, %s494
          %p496 = scmp.ne.s32.totalorder 0, %s495
          %s497 = smul.addr %s491, 8
          %s498 = scalar_lea.vmem %s3, %s497
          // Predicated region
          $region41: #{tpu_custom_call.1} parent=39 // pred_check
            %p499 = pneg %p496
          $region42: #{tpu_custom_call.1} parent=39 // pred_check_branch
            %501 = sbr.rel (%p499) target = $region44
          $region43: #{tpu_custom_call.1} parent=39 // pred_region
            // Predicated region
            $region45: #{tpu_custom_call.1} parent=43 // pred_check
              _
            $region46: #{tpu_custom_call.1} parent=43 // pred_check_branch
              %503 = sbr.rel (0) target = $region48
            $region47: #{tpu_custom_call.1} parent=43 // pred_region
              // Predicated region
              $region67: #{tpu_custom_call.1} parent=47 // pred_check
                _
              $region68: #{tpu_custom_call.1} parent=47 // pred_check_branch
                %587 = sbr.rel (0) target = $region70
              $region69: #{tpu_custom_call.1} parent=47 // pred_region
                %s588 = sdiv.u32.pop %s494, 18
                %s589 = srem.u32.pop %s494, 18
                // While loop
                $region71: #{tpu_custom_call.1} parent=69 // loop_pre_header
                  _
                $region72: #{tpu_custom_call.1} parent=69 // loop_header
                  %s591 = sphi 0, %s593
                  %p592 = scmp.ge.s32.totalorder %s591, %s588
                  %s596 = sphi 0, %s637
                  %s597 = sphi %s487, %s640
                  %s598 = sphi %s498, %s641
                $region73: #{tpu_custom_call.1} parent=69 // loop_header_branch
                  %595 = sbr.rel (%p592) target = $region77
                $region74: #{tpu_custom_call.1} parent=69 // loop_body
                  %v599 = vld [vmem:[%s597] sm:$0xff]
                  %600 = vst [vmem:[%s598] sm:$0xff] %v599
                  %v601 = vld [vmem:[%s597 + $0x8] sm:$0xff]
                  %602 = vst [vmem:[%s598 + $0x8] sm:$0xff] %v601
                  %v603 = vld [vmem:[%s597 + $0x10] sm:$0xff]
                  %604 = vst [vmem:[%s598 + $0x10] sm:$0xff] %v603
                  %v605 = vld [vmem:[%s597 + $0x18] sm:$0xff]
                  %606 = vst [vmem:[%s598 + $0x18] sm:$0xff] %v605
                  %v607 = vld [vmem:[%s597 + $0x20] sm:$0xff]
                  %608 = vst [vmem:[%s598 + $0x20] sm:$0xff] %v607
                  %v609 = vld [vmem:[%s597 + $0x28] sm:$0xff]
                  %610 = vst [vmem:[%s598 + $0x28] sm:$0xff] %v609
                  %v611 = vld [vmem:[%s597 + $0x30] sm:$0xff]
                  %612 = vst [vmem:[%s598 + $0x30] sm:$0xff] %v611
                  %v613 = vld [vmem:[%s597 + $0x38] sm:$0xff]
                  %614 = vst [vmem:[%s598 + $0x38] sm:$0xff] %v613
                  %v615 = vld [vmem:[%s597 + $0x40] sm:$0xff]
                  %616 = vst [vmem:[%s598 + $0x40] sm:$0xff] %v615
                  %v617 = vld [vmem:[%s597 + $0x48] sm:$0xff]
                  %618 = vst [vmem:[%s598 + $0x48] sm:$0xff] %v617
                  %v619 = vld [vmem:[%s597 + $0x50] sm:$0xff]
                  %620 = vst [vmem:[%s598 + $0x50] sm:$0xff] %v619
                  %v621 = vld [vmem:[%s597 + $0x58] sm:$0xff]
                  %622 = vst [vmem:[%s598 + $0x58] sm:$0xff] %v621
                  %v623 = vld [vmem:[%s597 + $0x60] sm:$0xff]
                  %624 = vst [vmem:[%s598 + $0x60] sm:$0xff] %v623
                  %v625 = vld [vmem:[%s597 + $0x68] sm:$0xff]
                  %626 = vst [vmem:[%s598 + $0x68] sm:$0xff] %v625
                  %v627 = vld [vmem:[%s597 + $0x70] sm:$0xff]
                  %628 = vst [vmem:[%s598 + $0x70] sm:$0xff] %v627
                  %v629 = vld [vmem:[%s597 + $0x78] sm:$0xff]
                  %630 = vst [vmem:[%s598 + $0x78] sm:$0xff] %v629
                  %v631 = vld [vmem:[%s597 + $0x80] sm:$0xff]
                  %632 = vst [vmem:[%s598 + $0x80] sm:$0xff] %v631
                  %v633 = vld [vmem:[%s597 + $0x88] sm:$0xff]
                  %634 = vst [vmem:[%s598 + $0x88] sm:$0xff] %v633
                  %s635 = sadd.s32 1, %s596
                  %p636 = scmp.ge.s32.totalorder %s635, %s588
                  %s637 = scalar_select %p636, 0, %s635
                  %s638 = smul.u32 %s637, 144
                  %s639 = smul.u32 %s637, 144
                  %s640 = scalar_lea.vmem %s487, %s638 [#allocation5]
                  %s641 = scalar_lea.vmem %s498, %s639
                $region75: #{tpu_custom_call.1} parent=69 // loop_footer
                  %s593 = sadd.s32 %s591, 1
                $region76: #{tpu_custom_call.1} parent=69 // loop_footer_branch
                  %590 = sbr.rel target = $region72
                $region77: #{tpu_custom_call.1} parent=69 // loop_exit
                  _
                %s642 = sdiv.u32.pop %s494, 18
                %s643 = srem.u32.pop %s494, 18
                %s644 = smul.u32 %s642, 18
                %s645 = smul.u32 8, %s644
                %s646 = scalar_lea.vmem %s487, %s645 [#allocation5]
                %s647 = smul.u32 8, %s644
                %s648 = scalar_lea.vmem %s498, %s647
                // While loop
                $region78: #{tpu_custom_call.1} parent=69 // loop_pre_header
                  _
                $region79: #{tpu_custom_call.1} parent=69 // loop_header
                  %s650 = sphi 0, %s652
                  %p651 = scmp.ge.s32.totalorder %s650, %s643
                  %s655 = sphi 0, %s662
                  %s656 = sphi %s646, %s665
                  %s657 = sphi %s648, %s666
                $region80: #{tpu_custom_call.1} parent=69 // loop_header_branch
                  %654 = sbr.rel (%p651) target = $region84
                $region81: #{tpu_custom_call.1} parent=69 // loop_body
                  %v658 = vld [vmem:[%s656] sm:$0xff]
                  %659 = vst [vmem:[%s657] sm:$0xff] %v658
                  %s660 = sadd.s32 1, %s655
                  %p661 = scmp.ge.s32.totalorder %s660, %s643
                  %s662 = scalar_select %p661, 0, %s660
                  %s663 = smul.u32 %s662, 8
                  %s664 = smul.u32 %s662, 8
                  %s665 = scalar_lea.vmem %s646, %s663 [#allocation5]
                  %s666 = scalar_lea.vmem %s648, %s664
                $region82: #{tpu_custom_call.1} parent=69 // loop_footer
                  %s652 = sadd.s32 %s650, 1
                $region83: #{tpu_custom_call.1} parent=69 // loop_footer_branch
                  %649 = sbr.rel target = $region79
                $region84: #{tpu_custom_call.1} parent=69 // loop_exit
                  _
              $region70: #{tpu_custom_call.1} parent=47 // pred_fallthru
                _
              // Predicated region
              $region85: #{tpu_custom_call.1} parent=47 // pred_check
                _
              $region86: #{tpu_custom_call.1} parent=47 // pred_check_branch
                %668 = sbr.rel target = $region88
              $region87: #{tpu_custom_call.1} parent=47 // pred_region
                _
              $region88: #{tpu_custom_call.1} parent=47 // pred_fallthru
                _
            $region48: #{tpu_custom_call.1} parent=43 // pred_fallthru
              _
            // Predicated region
            $region49: #{tpu_custom_call.1} parent=43 // pred_check
              _
            $region50: #{tpu_custom_call.1} parent=43 // pred_check_branch
              %505 = sbr.rel target = $region52
            $region51: #{tpu_custom_call.1} parent=43 // pred_region
              %s507 = sdiv.u32.pop %s494, 18
              %s508 = srem.u32.pop %s494, 18
              // While loop
              $region53: #{tpu_custom_call.1} parent=51 // loop_pre_header
                _
              $region54: #{tpu_custom_call.1} parent=51 // loop_header
                %s510 = sphi 0, %s512
                %p511 = scmp.ge.s32.totalorder %s510, %s507
                %s515 = sphi 0, %s556
                %s516 = sphi %s487, %s559
                %s517 = sphi %s498, %s560
              $region55: #{tpu_custom_call.1} parent=51 // loop_header_branch
                %514 = sbr.rel (%p511) target = $region59
              $region56: #{tpu_custom_call.1} parent=51 // loop_body
                %v518 = vld [vmem:[%s516] sm:$0xff]
                %519 = vst [vmem:[%s517] sm:$0xff] %v518
                %v520 = vld [vmem:[%s516 + $0x8] sm:$0xff]
                %521 = vst [vmem:[%s517 + $0x8] sm:$0xff] %v520
                %v522 = vld [vmem:[%s516 + $0x10] sm:$0xff]
                %523 = vst [vmem:[%s517 + $0x10] sm:$0xff] %v522
                %v524 = vld [vmem:[%s516 + $0x18] sm:$0xff]
                %525 = vst [vmem:[%s517 + $0x18] sm:$0xff] %v524
                %v526 = vld [vmem:[%s516 + $0x20] sm:$0xff]
                %527 = vst [vmem:[%s517 + $0x20] sm:$0xff] %v526
                %v528 = vld [vmem:[%s516 + $0x28] sm:$0xff]
                %529 = vst [vmem:[%s517 + $0x28] sm:$0xff] %v528
                %v530 = vld [vmem:[%s516 + $0x30] sm:$0xff]
                %531 = vst [vmem:[%s517 + $0x30] sm:$0xff] %v530
                %v532 = vld [vmem:[%s516 + $0x38] sm:$0xff]
                %533 = vst [vmem:[%s517 + $0x38] sm:$0xff] %v532
                %v534 = vld [vmem:[%s516 + $0x40] sm:$0xff]
                %535 = vst [vmem:[%s517 + $0x40] sm:$0xff] %v534
                %v536 = vld [vmem:[%s516 + $0x48] sm:$0xff]
                %537 = vst [vmem:[%s517 + $0x48] sm:$0xff] %v536
                %v538 = vld [vmem:[%s516 + $0x50] sm:$0xff]
                %539 = vst [vmem:[%s517 + $0x50] sm:$0xff] %v538
                %v540 = vld [vmem:[%s516 + $0x58] sm:$0xff]
                %541 = vst [vmem:[%s517 + $0x58] sm:$0xff] %v540
                %v542 = vld [vmem:[%s516 + $0x60] sm:$0xff]
                %543 = vst [vmem:[%s517 + $0x60] sm:$0xff] %v542
                %v544 = vld [vmem:[%s516 + $0x68] sm:$0xff]
                %545 = vst [vmem:[%s517 + $0x68] sm:$0xff] %v544
                %v546 = vld [vmem:[%s516 + $0x70] sm:$0xff]
                %547 = vst [vmem:[%s517 + $0x70] sm:$0xff] %v546
                %v548 = vld [vmem:[%s516 + $0x78] sm:$0xff]
                %549 = vst [vmem:[%s517 + $0x78] sm:$0xff] %v548
                %v550 = vld [vmem:[%s516 + $0x80] sm:$0xff]
                %551 = vst [vmem:[%s517 + $0x80] sm:$0xff] %v550
                %v552 = vld [vmem:[%s516 + $0x88] sm:$0xff]
                %553 = vst [vmem:[%s517 + $0x88] sm:$0xff] %v552
                %s554 = sadd.s32 1, %s515
                %p555 = scmp.ge.s32.totalorder %s554, %s507
                %s556 = scalar_select %p555, 0, %s554
                %s557 = smul.u32 %s556, 144
                %s558 = smul.u32 %s556, 144
                %s559 = scalar_lea.vmem %s487, %s557 [#allocation5]
                %s560 = scalar_lea.vmem %s498, %s558
              $region57: #{tpu_custom_call.1} parent=51 // loop_footer
                %s512 = sadd.s32 %s510, 1
              $region58: #{tpu_custom_call.1} parent=51 // loop_footer_branch
                %509 = sbr.rel target = $region54
              $region59: #{tpu_custom_call.1} parent=51 // loop_exit
                _
              %s561 = sdiv.u32.pop %s494, 18
              %s562 = srem.u32.pop %s494, 18
              %s563 = smul.u32 %s561, 18
              %s564 = smul.u32 8, %s563
              %s565 = scalar_lea.vmem %s487, %s564 [#allocation5]
              %s566 = smul.u32 8, %s563
              %s567 = scalar_lea.vmem %s498, %s566
              // While loop
              $region60: #{tpu_custom_call.1} parent=51 // loop_pre_header
                _
              $region61: #{tpu_custom_call.1} parent=51 // loop_header
                %s569 = sphi 0, %s571
                %p570 = scmp.ge.s32.totalorder %s569, %s562
                %s574 = sphi 0, %s581
                %s575 = sphi %s565, %s584
                %s576 = sphi %s567, %s585
              $region62: #{tpu_custom_call.1} parent=51 // loop_header_branch
                %573 = sbr.rel (%p570) target = $region66
              $region63: #{tpu_custom_call.1} parent=51 // loop_body
                %v577 = vld [vmem:[%s575] sm:$0xff]
                %578 = vst [vmem:[%s576] sm:$0xff] %v577
                %s579 = sadd.s32 1, %s574
                %p580 = scmp.ge.s32.totalorder %s579, %s562
                %s581 = scalar_select %p580, 0, %s579
                %s582 = smul.u32 %s581, 8
                %s583 = smul.u32 %s581, 8
                %s584 = scalar_lea.vmem %s565, %s582 [#allocation5]
                %s585 = scalar_lea.vmem %s567, %s583
              $region64: #{tpu_custom_call.1} parent=51 // loop_footer
                %s571 = sadd.s32 %s569, 1
              $region65: #{tpu_custom_call.1} parent=51 // loop_footer_branch
                %568 = sbr.rel target = $region61
              $region66: #{tpu_custom_call.1} parent=51 // loop_exit
                _
            $region52: #{tpu_custom_call.1} parent=43 // pred_fallthru
              _
          $region44: #{tpu_custom_call.1} parent=39 // pred_fallthru
            _
          %669 = vnop
        $region40: #{tpu_custom_call.1} parent=31 // pred_fallthru
          _
      $region32: #{tpu_custom_call.1} parent=5 // pred_fallthru
        _
      %p670 = scmp.le.s32.totalorder 2, %s13
      // Predicated region
      $region89: #{tpu_custom_call.1} parent=5 // pred_check
        %p671 = pneg %p670
      $region90: #{tpu_custom_call.1} parent=5 // pred_check_branch
        %673 = sbr.rel (%p671) target = $region92
      $region91: #{tpu_custom_call.1} parent=5 // pred_region
        %s674 = ssub.s32 %s13, 2
        // Predicated region
        $region93: #{tpu_custom_call.1} parent=91 // pred_check
          %p675 = pneg %p110
        $region94: #{tpu_custom_call.1} parent=91 // pred_check_branch
          %677 = sbr.rel (%p675) target = $region96
        $region95: #{tpu_custom_call.1} parent=91 // pred_region
          %s678 = sand.u32 %s95, 1
          %s679 = sand.u32 %s95, 1
          %s680 = smul.addr %s679, 144
          %s681 = scalar_lea.vmem [#allocation5], %s680
        $region96: #{tpu_custom_call.1} parent=91 // pred_fallthru
          _
      $region92: #{tpu_custom_call.1} parent=5 // pred_fallthru
        _
    $region6: #{tpu_custom_call.1} parent=1 // loop_footer
      %s17 = sadd.s32 1, %s13
    $region7: #{tpu_custom_call.1} parent=1 // loop_footer_branch
      %12 = sbr.rel target = $region3
    $region8: #{tpu_custom_call.1} parent=1 // loop_exit
      _
    %682 = vsyncpa [#allocation4], 1
    %s683 = scalar_lea.sflag [#allocation4], 1
    %684 = vsyncpa %s683, 1

</llo_original>
